<compile_context>
chip_gen: v6e
topology: v6e:2x2x1
jax: 0.10.0
libtpu: 0.0.40
codegen_flags: <defaults>
</compile_context>

<pallas_src>
import functools

import jax
import jax.numpy as jnp
from jax import lax
from jax.experimental import pallas as pl
from jax.experimental.pallas import tpu as pltpu

LANE = 128
SUBLANE = 8


def _round_up(v, m):
    return ((v + m - 1) // m) * m


def _channel_fusion_kernel(x_ref, wb_ref, o_ref, acc_ref, *, hw, hw_tile, needs_mask):
    # x_ref:   (row_tile, hw_tile)  native dtype
    # wb_ref:  (row_tile, 2)        fp32 [scale | bias] per row
    # o_ref:   (row_tile, 1)        output (same dtype as x)
    # acc_ref: (row_tile, 1)        fp32 running sum over HW chunks
    k = pl.program_id(1)
    last_k = pl.num_programs(1) - 1

    @pl.when(k == 0)
    def _():
        acc_ref[...] = jnp.zeros_like(acc_ref)

    def _accumulate(masked):
        x = x_ref[...].astype(jnp.float32)
        if masked:
            # Zero the padded tail of the final HW chunk so the sum stays exact.
            lane = lax.broadcasted_iota(jnp.int32, x.shape, dimension=1)
            pos = k * hw_tile + lane
            x = jnp.where(pos < hw, x, 0.0)
        # Cross-lane reduce rides the XLU slot; hidden under the HBM stream.
        acc_ref[...] += jnp.sum(x, axis=-1, keepdims=True)

    if needs_mask:
        # Mask only on the last chunk: keeps the hot loop free of VPU mask ops.
        @pl.when(k != last_k)
        def _():
            _accumulate(False)

        @pl.when(k == last_k)
        def _():
            _accumulate(True)
    else:
        _accumulate(False)

    @pl.when(k == last_k)
    def _():
        pooled = acc_ref[...] * (1.0 / hw)            # mean, fp32
        w = wb_ref[:, 0:1]
        b = wb_ref[:, 1:2]
        o_ref[...] = jax.nn.sigmoid(pooled * w + b).astype(o_ref.dtype)


def channel_wise_fusion(x, weight_vector, bias_vector, *,
                        max_block_bytes=12 * 1024 * 1024):
    """x: (B, C, H, W); weight_vector/bias_vector: (1, C, 1, 1). Returns (B, C, 1, 1)."""
    B, C, H, W = x.shape
    nrows = B * C
    hw = H * W
    itemsize = jnp.dtype(x.dtype).itemsize

    # Free, metadata-only reshape; keep the native dtype (no extra HBM round trip).
    x_rows = x.reshape(nrows, hw)

    # Tiny per-row [scale | bias] table (channel params broadcast over batch), one DMA.
    w_rows = jnp.broadcast_to(
        weight_vector.reshape(1, C).astype(jnp.float32), (B, C)).reshape(nrows, 1)
    b_rows = jnp.broadcast_to(
        bias_vector.reshape(1, C).astype(jnp.float32), (B, C)).reshape(nrows, 1)
    wb_rows = jnp.concatenate([w_rows, b_rows], axis=1)          # (nrows, 2) fp32

    # --- tile selection -----------------------------------------------------
    # Row tile: aim for >= 2 row blocks so the "parallel" axis shards across the two
    # TensorCores on v7x; keep it sublane-aligned (multiple of 8), capped at 512.
    if nrows <= SUBLANE:
        row_tile = nrows
    else:
        row_tile = min(512, _round_up(pl.cdiv(nrows, 2), SUBLANE))

    def _hw_budget(rt):
        elems = max_block_bytes // (rt * itemsize)
        return max(LANE, (elems // LANE) * LANE)

    # If the spatial extent doesn't fit in one chunk, shrink row_tile (toward 128) before
    # shrinking hw_tile: longer contiguous lane runs per DMA descriptor, same step count.
    while row_tile > 128 and hw > _hw_budget(row_tile):
        row_tile = max(128, _round_up(row_tile // 2, SUBLANE))

    hw_budget = _hw_budget(row_tile)
    hw_tile = hw if hw <= hw_budget else hw_budget               # full dim or multiple of 128
    needs_mask = (hw % hw_tile) != 0                             # only possible when multi-chunk

    grid = (pl.cdiv(nrows, row_tile), pl.cdiv(hw, hw_tile))

    kernel = functools.partial(
        _channel_fusion_kernel, hw=hw, hw_tile=hw_tile, needs_mask=needs_mask)

    out = pl.pallas_call(
        kernel,
        out_shape=jax.ShapeDtypeStruct((nrows, 1), x.dtype),
        grid_spec=pltpu.PrefetchScalarGridSpec(
            num_scalar_prefetch=0,
            grid=grid,
            in_specs=[
                pl.BlockSpec((row_tile, hw_tile), lambda i, k: (i, k)),
                pl.BlockSpec((row_tile, 2), lambda i, k: (i, 0)),
            ],
            out_specs=pl.BlockSpec((row_tile, 1), lambda i, k: (i, 0)),
            scratch_shapes=[pltpu.VMEM((row_tile, 1), jnp.float32)],
        ),
        compiler_params=pltpu.CompilerParams(
            # Rows are independent (megacore-shardable on v7x); HW is the reduction axis.
            dimension_semantics=("parallel", "arbitrary"),
            # 2 x 12 MiB double-buffered x blocks + small param/out/acc buffers (~26 MiB);
            # 48 MiB is below v7x's 64 MiB physical VMEM and well below v5e/v6e's 128 MiB.
            vmem_limit_bytes=48 * 1024 * 1024,
        ),
    )(x_rows, wb_rows)

    return out.reshape(B, C, 1, 1)


def _reference(x, weight_vector, bias_vector):
    pooled = jnp.mean(x, axis=(2, 3), keepdims=True)
    return jax.nn.sigmoid(pooled * weight_vector + bias_vector)


if __name__ == "__main__":
    key = jax.random.PRNGKey(0)

    # --- test 1: module-sized shapes (single HW chunk, no mask) -------------
    B, C, H, W = 2, 4, 16, 16
    k1, k2 = jax.random.split(key)
    x = jax.random.normal(k1, (B, C, H, W), dtype=jnp.float32)
    # nn.Parameter(torch.ones / torch.zeros) equivalents.
    weight_vector = jnp.ones((1, C, 1, 1), dtype=jnp.float32)
    bias_vector = jnp.zeros((1, C, 1, 1), dtype=jnp.float32)

    out = channel_wise_fusion(x, weight_vector, bias_vector)
    out = jax.block_until_ready(out)
    ref = _reference(x, weight_vector, bias_vector)
    assert out.shape == (B, C, 1, 1)
    assert jnp.allclose(out, ref, atol=1e-5, rtol=1e-5)

    # --- test 2: tiny block budget to exercise multi-chunk HW + gated mask +
    #             >=2 row blocks, with non-trivial weights/bias -------------
    B2, C2, H2, W2 = 2, 8, 20, 20
    x2 = jax.random.normal(k2, (B2, C2, H2, W2), dtype=jnp.float32)
    w2 = 0.5 + 0.1 * jnp.arange(C2, dtype=jnp.float32).reshape(1, C2, 1, 1)
    b2 = 0.05 * jnp.arange(C2, dtype=jnp.float32).reshape(1, C2, 1, 1) - 0.2

    out2 = channel_wise_fusion(x2, w2, b2, max_block_bytes=8 * 1024)
    out2 = jax.block_until_ready(out2)
    ref2 = _reference(x2, w2, b2)
    assert out2.shape == (B2, C2, 1, 1)
    assert jnp.allclose(out2, ref2, atol=1e-5, rtol=1e-5)

    print("KERNEL_OK")
</pallas_src>

<mosaic_0001>
module attributes {stable_mosaic.version = 11 : i64} {
  func.func @_channel_fusion_kernel(%arg0: i32, %arg1: i32, %arg2: memref<8x256xf32, #tpu.memory_space<vmem>>, %arg3: memref<8x2xf32, #tpu.memory_space<vmem>>, %arg4: memref<8x1xf32, #tpu.memory_space<vmem>>, %arg5: memref<8x1xf32, #tpu.memory_space<vmem>>) attributes {dimension_semantics = [#tpu.dimension_semantics<parallel>, #tpu.dimension_semantics<arbitrary>], iteration_bounds = array<i64: 1, 1>, scalar_prefetch = 0 : i64, scratch_operands = 1 : i64, tpu.core_type = #tpu.core_type<tc>, window_params = [{transform_indices = @transform_0, window_bounds = array<i64: 8, 256>}, {transform_indices = @transform_1, window_bounds = array<i64: 8, 2>}, {transform_indices = @transform_2, window_bounds = array<i64: 8, 1>}]} {
    %c0_i32 = arith.constant 0 : i32
    %0 = arith.cmpi eq, %arg1, %c0_i32 : i32
    %1 = arith.extui %0 : i1 to i32
    %c0_i32_0 = arith.constant 0 : i32
    %2 = arith.cmpi ne, %1, %c0_i32_0 : i32
    scf.if %2 {
      %cst_8 = arith.constant 0.000000e+00 : f32
      %12 = vector.broadcast %cst_8 : f32 to vector<8x1xf32>
      %c0_9 = arith.constant 0 : index
      %c0_10 = arith.constant 0 : index
      %13 = vector.load %arg5[%c0_9, %c0_10] : memref<8x1xf32, #tpu.memory_space<vmem>>, vector<8x1xf32>
      tpu.vector_store %arg5[%c0_9, %c0_10], %12 {strides = array<i32>} : memref<8x1xf32, #tpu.memory_space<vmem>>, vector<8x1xf32>,
    } else {
    }
    %c0 = arith.constant 0 : index
    %c0_1 = arith.constant 0 : index
    %3 = vector.load %arg2[%c0, %c0_1] : memref<8x256xf32, #tpu.memory_space<vmem>>, vector<8x256xf32>
    %c0_2 = arith.constant 0 : index
    %c0_3 = arith.constant 0 : index
    %4 = vector.load %arg5[%c0_2, %c0_3] : memref<8x1xf32, #tpu.memory_space<vmem>>, vector<8x1xf32>
    %cst = arith.constant dense<0.000000e+00> : vector<8xf32>
    %5 = vector.multi_reduction <add>, %3, %cst [1] : vector<8x256xf32> to vector<8xf32>
    %6 = vector.shape_cast %5 : vector<8xf32> to vector<8x1xf32>
    %7 = arith.addf %4, %6 : vector<8x1xf32>
    %c0_4 = arith.constant 0 : index
    %c0_5 = arith.constant 0 : index
    %8 = vector.load %arg5[%c0_4, %c0_5] : memref<8x1xf32, #tpu.memory_space<vmem>>, vector<8x1xf32>
    tpu.vector_store %arg5[%c0_4, %c0_5], %7 {strides = array<i32>} : memref<8x1xf32, #tpu.memory_space<vmem>>, vector<8x1xf32>,
    %c0_i32_6 = arith.constant 0 : i32
    %9 = arith.cmpi eq, %arg1, %c0_i32_6 : i32
    %10 = arith.extui %9 : i1 to i32
    %c0_i32_7 = arith.constant 0 : i32
    %11 = arith.cmpi ne, %10, %c0_i32_7 : i32
    scf.if %11 {
      %c0_8 = arith.constant 0 : index
      %c0_9 = arith.constant 0 : index
      %12 = vector.load %arg5[%c0_8, %c0_9] : memref<8x1xf32, #tpu.memory_space<vmem>>, vector<8x1xf32>
      %cst_10 = arith.constant 3.906250e-03 : f32
      %13 = vector.broadcast %cst_10 : f32 to vector<8x1xf32>
      %14 = arith.mulf %12, %13 : vector<8x1xf32>
      %c0_11 = arith.constant 0 : index
      %c0_12 = arith.constant 0 : index
      %15 = vector.load %arg3[%c0_11, %c0_12] : memref<8x2xf32, #tpu.memory_space<vmem>>, vector<8x1xf32>
      %c0_13 = arith.constant 0 : index
      %c1 = arith.constant 1 : index
      %16 = vector.load %arg3[%c0_13, %c1] : memref<8x2xf32, #tpu.memory_space<vmem>>, vector<8x1xf32>
      %17 = arith.mulf %14, %15 : vector<8x1xf32>
      %18 = arith.addf %17, %16 : vector<8x1xf32>
      %19 = arith.negf %18 : vector<8x1xf32>
      %20 = math.exp %19 : vector<8x1xf32>
      %cst_14 = arith.constant 1.000000e+00 : f32
      %21 = vector.broadcast %cst_14 : f32 to vector<8x1xf32>
      %22 = arith.addf %21, %20 : vector<8x1xf32>
      %23 = arith.divf %21, %22 : vector<8x1xf32>
      %c0_15 = arith.constant 0 : index
      %c0_16 = arith.constant 0 : index
      %24 = vector.load %arg4[%c0_15, %c0_16] : memref<8x1xf32, #tpu.memory_space<vmem>>, vector<8x1xf32>
      tpu.vector_store %arg4[%c0_15, %c0_16], %23 {strides = array<i32>} : memref<8x1xf32, #tpu.memory_space<vmem>>, vector<8x1xf32>,
    } else {
    }
    return
  }
  func.func @transform_0(%arg0: i32, %arg1: i32) -> (i32, i32) {
    %c0_i32 = arith.constant 0 : i32
    return %arg0, %arg1 : i32, i32
  }
  func.func @transform_1(%arg0: i32, %arg1: i32) -> (i32, i32) {
    %c0_i32 = arith.constant 0 : i32
    %c0_i32_0 = arith.constant 0 : i32
    return %arg0, %c0_i32 : i32, i32
  }
  func.func @transform_2(%arg0: i32, %arg1: i32) -> (i32, i32) {
    %c0_i32 = arith.constant 0 : i32
    %c0_i32_0 = arith.constant 0 : i32
    return %arg0, %c0_i32 : i32, i32
  }
}

</mosaic_0001>

<llo_original>
// kernel: tpu_custom_call.1
$region0: #{tpu_custom_call.1}
  #allocation0 [shape = 'u32[]', space=smem, size = 0x4, offset = 0x4, fixed_abs, tag = 'smem constant byte address 0x4 - core index']
  #allocation1 [shape = 'u32[144,128]{1,0:T(1,128)}', space=vmem, size = 0x12000, scoped, tag = 'internal scratch']
  #allocation2 [shape = 'f32[8,1]{1,0:T(8,128)}', space=vmem, size = 0x1000, scoped, tag = 'scratch operand']
  %s0 = inlined_call_operand.hbm [shape: f32[8,256], index: 0, kind: input, shape index: {}]
  %s1 = inlined_call_operand.vmem [shape: f32[8,2], index: 1, kind: input, shape index: {}]
  %s2 = inlined_call_operand.vmem [shape: f32[8,1], index: 2, kind: output, shape index: {}]
  %s3 = sld [smem:[#allocation0]]
  $region30: #{tpu_custom_call.1} parent=0
    _
  %s5 = ssub.s32 1, %s3
  %s6 = scalar_select 0, %s5, %s3
  $region1: #{tpu_custom_call.1} parent=0
    #allocation3 [shape = 'u8[8192]{0}', space=vmem, size = 0x2000, scoped, tag = 'input window, operand 0, single buffered']
    #allocation4 [shape = 's32[1]{0}', space=sflag, size = 0x4, scoped, tag = 'scoped memory for tpu_custom_call.1']
    %7 = vsyncpa [#allocation4], 0
    // Predicated region
    $region2: #{tpu_custom_call.1} parent=1 // pred_check
      _
    $region3: #{tpu_custom_call.1} parent=1 // pred_check_branch
      %9 = sbr.rel (0) target = $region5
    $region4: #{tpu_custom_call.1} parent=1 // pred_region
      %s11 = ssub.s32 256, 256
      %12 = vsyncadd [#allocation4], %s11
      %s14 = sshll.u32 [#allocation3], 4
      %s15 = int_to_ptr.vmem [resolvable:$true] %s14
      %17 = dma.hbm_to_vmem [thread:$0]  %s0, 256, %s15, [#allocation4]
    $region5: #{tpu_custom_call.1} parent=1 // pred_fallthru
      _
    // Predicated region
    $region6: #{tpu_custom_call.1} parent=1 // pred_check
      _
    $region7: #{tpu_custom_call.1} parent=1 // pred_check_branch
      %19 = sbr.rel (0) target = $region9
    $region8: #{tpu_custom_call.1} parent=1 // pred_region
      _
    $region9: #{tpu_custom_call.1} parent=1 // pred_fallthru
      _
    // Predicated region
    $region10: #{tpu_custom_call.1} parent=1 // pred_check
      _
    $region11: #{tpu_custom_call.1} parent=1 // pred_check_branch
      %21 = sbr.rel (0) target = $region13
    $region12: #{tpu_custom_call.1} parent=1 // pred_region
      %22 = dma.done [#allocation4], 256
    $region13: #{tpu_custom_call.1} parent=1 // pred_fallthru
      _
    %p23 = scmp.eq.s32.totalorder 0, 0
    // Predicated region
    $region14: #{tpu_custom_call.1} parent=1 // pred_check
      %p24 = pneg %p23
    $region15: #{tpu_custom_call.1} parent=1 // pred_check_branch
      %26 = sbr.rel (%p24) target = $region17
    $region16: #{tpu_custom_call.1} parent=1 // pred_region
      %vm27 = vcmask 7168
      %28 = vst.msk [vmem:[#allocation2] sm:$0xff] %vm27, 0.0
    $region17: #{tpu_custom_call.1} parent=1 // pred_fallthru
      _
    %v29 = vld [vmem:[#allocation3] sm:$0xff]
    %v30 = vld [vmem:[#allocation3 + $0x8] sm:$0xff]
    %v31 = vld [vmem:[#allocation2] sm:$0xff]
    %v32 = vadd.f32 %v29, %v30
    %33 = vadd.xlane.f32.xlu0 %v32
    %v34 = vpop.xlane.xlu0 %33
    %v35 = vadd.f32 %v31, %v34
    %vm36 = vcmask 7168
    %37 = vst.msk [vmem:[#allocation2] sm:$0xff] %vm36, %v35
    // Predicated region
    $region18: #{tpu_custom_call.1} parent=1 // pred_check
      %p38 = pneg %p23
    $region19: #{tpu_custom_call.1} parent=1 // pred_check_branch
      %40 = sbr.rel (%p38) target = $region21
    $region20: #{tpu_custom_call.1} parent=1 // pred_region
      %v41 = vld [vmem:[#allocation2] sm:$0xff]
      %v42 = vmul.f32 %v41, 0.00390625
      %v43 = vld [vmem:[%s1] sm:$0xff]
      %v44 = vmul.f32 %v42, %v43
      %46 = vrot.lane.b32.xlu0 %v43, 127
      %v47 = vpop.permute.xlu0 %46
      %v49 = vadd.f32 %v44, %v47
      %v50 = vxor.u32 %v49, 2147483648
      %v51 = vmul.f32 %v50, 1.442695
      %v52 = vpow.pop %v51
      %v53 = vadd.f32 %v52, 1.0
      %v54 = vrcp.pop %v53
      %v55 = vmul.f32 1.0, %v54
      %56 = vst.msk [vmem:[%s2] sm:$0xff] %vm36, %v55
    $region21: #{tpu_custom_call.1} parent=1 // pred_fallthru
      _
    // Predicated region
    $region22: #{tpu_custom_call.1} parent=1 // pred_check
      _
    $region23: #{tpu_custom_call.1} parent=1 // pred_check_branch
      %58 = sbr.rel (0) target = $region25
    $region24: #{tpu_custom_call.1} parent=1 // pred_region
      _
    $region25: #{tpu_custom_call.1} parent=1 // pred_fallthru
      _
    // Predicated region
    $region26: #{tpu_custom_call.1} parent=1 // pred_check
      _
    $region27: #{tpu_custom_call.1} parent=1 // pred_check_branch
      %60 = sbr.rel (0) target = $region29
    $region28: #{tpu_custom_call.1} parent=1 // pred_region
      _
    $region29: #{tpu_custom_call.1} parent=1 // pred_fallthru
      _
    %61 = vsyncpa [#allocation4], 1

</llo_original>
